<compile_context>
chip_gen: v7x
topology: tpu7x:2x2x1
jax: 0.10.0
libtpu: 0.0.40
codegen_flags: <defaults>
</compile_context>

<pallas_src>
import numpy as np
import jax
import jax.numpy as jnp
from jax.experimental import pallas as pl
from jax.experimental.pallas import tpu as pltpu

N_WIRES = 4
DIM = 2 ** N_WIRES  # 16
LANES = 128

# Row offsets of the blocks inside the single packed weight buffer (R, 128).
R_UQ   = 0      # (128,128) block-diag [Re(U_i)^T | Im(U_i)^T] per 16-d segment
R_W1A  = 128    # conv1 -> h1 flat lanes   0..127  (t = 0..15)
R_W1B  = 256    # conv1 -> h1 flat lanes 128..191  (stored in cols 0..63)
R_W2A  = 384    # conv2 from h1a -> output lanes 8..55 (t2*16+o order)
R_W2B  = 512    # conv2 from h1b -> output lanes 8..55
R_AGG  = 640    # |psi|^2 -> per-segment wire-0 probs (cols 0..7)
R_DEN  = 768    # |psi|^2 -> per-segment totals (cols 0..7, duplicated pairs)
R_FC1  = 896    # fc1: rows 0..7 quantum, rows 8..55 classic (permuted), cols 0..17
R_FC2  = 1024   # fc2: rows 0..17, cols 0..8
R_FC3  = 1152   # fc3: rows 0..8,  cols 0..1
R_BIAS = 1280   # 6 bias rows (b1a, b1b, b2, fc1b, fc2b, fc3b[-1e30 padded])
N_ROWS = 1288


# ----------------------------------------------------------------------------
# Quantum-circuit construction (pure numpy glue: builds a 16x16 unitary).
# ----------------------------------------------------------------------------
def _u3(theta, phi, lam):
    c, s = np.cos(theta / 2.0), np.sin(theta / 2.0)
    return np.array(
        [[c, -np.exp(1j * lam) * s],
         [np.exp(1j * phi) * s, np.exp(1j * (phi + lam)) * c]], dtype=complex)


def _ry(t):
    c, s = np.cos(t / 2.0), np.sin(t / 2.0)
    return np.array([[c, -s], [s, c]], dtype=complex)


def _rz(t):
    return np.array([[np.exp(-1j * t / 2.0), 0], [0, np.exp(1j * t / 2.0)]],
                    dtype=complex)


def _rx(t):
    c, s = np.cos(t / 2.0), np.sin(t / 2.0)
    return np.array([[c, -1j * s], [-1j * s, c]], dtype=complex)


_PAULI_X = np.array([[0, 1], [1, 0]], dtype=complex)


def _embed_single(G, w):
    M = np.array([[1.0 + 0.0j]])
    for q in range(N_WIRES):
        M = np.kron(M, G if q == w else np.eye(2, dtype=complex))
    return M


def _embed_controlled(G, ctrl, tgt):
    M = np.zeros((DIM, DIM), dtype=complex)
    for idx in range(DIM):
        bits = [(idx >> (N_WIRES - 1 - w)) & 1 for w in range(N_WIRES)]
        if bits[ctrl] == 0:
            M[idx, idx] = 1.0
        else:
            for ot in (0, 1):
                nb = list(bits)
                nb[tgt] = ot
                oidx = 0
                for w in range(N_WIRES):
                    oidx |= nb[w] << (N_WIRES - 1 - w)
                M[oidx, idx] = G[ot, bits[tgt]]
    return M


def _cnot(c, t):
    return _embed_controlled(_PAULI_X, c, t)


def _u_su4(p, wires):
    a, b = wires
    return [
        _embed_single(_u3(p[0], p[1], p[2]), a),
        _embed_single(_u3(p[3], p[4], p[5]), b),
        _cnot(a, b),
        _embed_single(_ry(p[6]), a),
        _embed_single(_rz(p[7]), b),
        _cnot(b, a),
        _embed_single(_ry(p[8]), a),
        _cnot(a, b),
        _embed_single(_u3(p[9], p[10], p[11]), a),
        _embed_single(_u3(p[12], p[13], p[14]), b),
    ]


def _pooling_ansatz1(p, wires):
    a, b = wires
    return [
        _embed_controlled(_rz(p[0]), a, b),   # CRZ
        _embed_single(_PAULI_X, a),           # PauliX on control
        _embed_controlled(_rx(p[1]), a, b),   # CRX
    ]


def _circuit_unitary(params34):
    p1 = params34[0:15]
    p2 = params34[15:30]
    p3 = params34[30:32]
    p4 = params34[32:34]
    gates = []
    for w in ([0, 3], [0, 1], [2, 3], [1, 2]):      # conv_layer1
        gates += _u_su4(p1, w)
    gates += _pooling_ansatz1(p3, [1, 0])           # pooling_layer1
    gates += _pooling_ansatz1(p3, [3, 2])
    gates += _u_su4(p2, [0, 2])                     # conv_layer2
    gates += _pooling_ansatz1(p4, [2, 0])           # pooling_layer2
    U = np.eye(DIM, dtype=complex)
    for g in gates:
        U = g @ U
    return U


# ----------------------------------------------------------------------------
# Pallas kernel: the entire forward hot path as 10 lane-aligned matmuls.
# ----------------------------------------------------------------------------
def net_kernel(x_ref, w_ref, out_ref):
    f32 = jnp.float32

    def mm(a, b):
        return jnp.dot(a, b, preferred_element_type=f32)

    xq = x_ref[0:1, :]                      # (1,128): 4x16 quantum segments in lanes 0..63
    x4 = x_ref[1:2, :]                      # (1,128): 76 classical features in lanes 0..75

    # ---- quantum layers: block-diagonal unitary, |psi|^2, wire-0 marginals.
    s = mm(xq, w_ref[R_UQ:R_UQ + 128, :])                     # (1,128) [Re|Im] per segment
    sq = s * s
    q_un = mm(sq, w_ref[R_AGG:R_AGG + 128, :])                # lanes 0..7: unnormalized P(wire0)
    den = mm(sq, w_ref[R_DEN:R_DEN + 128, :])                 # lanes 0..7: per-segment ||x||^2 (unitarity)
    q = q_un * pl.reciprocal(jnp.maximum(den, 1e-30), approx=False)

    # ---- conv1 (folded banded matmul) + tanh; h1 flat, time-major (t*8+c).
    h1a = jnp.tanh(mm(x4, w_ref[R_W1A:R_W1A + 128, :]) + w_ref[R_BIAS:R_BIAS + 1, :])
    h1b = jnp.tanh(mm(x4, w_ref[R_W1B:R_W1B + 128, :]) + w_ref[R_BIAS + 1:R_BIAS + 2, :])

    # ---- conv2 (folded matmul) + tanh; output already at lanes 8..55 (t2*16+o).
    h2 = jnp.tanh(mm(h1a, w_ref[R_W2A:R_W2A + 128, :]) +
                  mm(h1b, w_ref[R_W2B:R_W2B + 128, :]) +
                  w_ref[R_BIAS + 2:R_BIAS + 3, :])

    # Dropout1d: identity (eval mode).
    # ---- concat-free head input: quantum probs live in lanes 0..7, classic 8..55.
    z = q + h2

    f1 = jnp.tanh(mm(z, w_ref[R_FC1:R_FC1 + 128, :]) + w_ref[R_BIAS + 3:R_BIAS + 4, :])
    f2 = jnp.tanh(mm(f1, w_ref[R_FC2:R_FC2 + 128, :]) + w_ref[R_BIAS + 4:R_BIAS + 5, :])
    logits = mm(f2, w_ref[R_FC3:R_FC3 + 128, :]) + w_ref[R_BIAS + 5:R_BIAS + 6, :]
    # lanes >= 2 hold -1e30 (via the bias row) so the lane-dense softmax ignores them.
    m = jnp.max(logits, axis=1, keepdims=True)
    e = jnp.exp(logits - m)
    out_ref[...] = e * pl.reciprocal(jnp.sum(e, axis=1, keepdims=True), approx=False)


# ----------------------------------------------------------------------------
# Parameter construction: fold everything into one packed (N_ROWS, 128) buffer.
# ----------------------------------------------------------------------------
def init_params():
    key = jax.random.PRNGKey(0)
    ks = jax.random.split(key, 16)

    def nrm(k, shape, fan_in):
        return np.asarray(jax.random.normal(k, shape, jnp.float32)) / np.sqrt(fan_in)

    conv1_w = nrm(ks[0], (8, 1, 30), 30)       # (out=8, in=1, k=30)
    conv1_b = nrm(ks[1], (8,), 30)
    conv2_w = nrm(ks[2], (16, 8, 20), 8 * 20)  # (out=16, in=8, k=20)
    conv2_b = nrm(ks[3], (16,), 8 * 20)
    fc1_w = nrm(ks[4], (18, 56), 56)
    fc1_b = nrm(ks[5], (18,), 56)
    fc2_w = nrm(ks[6], (9, 18), 18)
    fc2_b = nrm(ks[7], (9,), 18)
    fc3_w = nrm(ks[8], (2, 9), 9)
    fc3_b = nrm(ks[9], (2,), 9)

    W = np.zeros((N_ROWS, LANES), np.float32)

    # --- quantum: block-diagonal [Re|Im] unitaries + aggregation matrices.
    for i in range(4):
        qp = np.asarray(jax.random.normal(ks[10 + i], (34,), jnp.float32))
        U = _circuit_unitary(qp)
        W[R_UQ + 16 * i:R_UQ + 16 * i + 16, 32 * i:32 * i + 16] = np.real(U).T
        W[R_UQ + 16 * i:R_UQ + 16 * i + 16, 32 * i + 16:32 * i + 32] = np.imag(U).T
        for part in (0, 16):                     # real / imag halves
            for j in range(16):
                r = 32 * i + part + j
                W[R_AGG + r, 2 * i + (0 if j < 8 else 1)] = 1.0   # P(wire0 = 0/1)
                W[R_DEN + r, 2 * i] = 1.0                          # segment total
                W[R_DEN + r, 2 * i + 1] = 1.0

    # --- conv1 folded: h1[t*8+c] = b1[c] + sum_k conv1_w[c,0,k] * x4[2t+k].
    for t in range(24):
        for c in range(8):
            f = t * 8 + c
            blk, col, brow = (R_W1A, f, R_BIAS) if f < 128 else (R_W1B, f - 128, R_BIAS + 1)
            for k in range(30):
                W[blk + 2 * t + k, col] = conv1_w[c, 0, k]
            W[brow, col] = conv1_b[c]

    # --- conv2 folded: output lanes 8 + t2*16 + o (time-major flatten).
    for t2 in range(3):
        for o in range(16):
            col = 8 + t2 * 16 + o
            W[R_BIAS + 2, col] = conv2_b[o]
            for c in range(8):
                for k in range(20):
                    g = (2 * t2 + k) * 8 + c
                    if g < 128:
                        W[R_W2A + g, col] = conv2_w[o, c, k]
                    else:
                        W[R_W2B + g - 128, col] = conv2_w[o, c, k]

    # --- fc1: rows 0..7 quantum, rows 8 + t*16 + o map to PyTorch's
    #     channel-major flatten index 8 + o*3 + t.
    fc1_wT = fc1_w.T                              # (56, 18)
    W[R_FC1:R_FC1 + 8, 0:18] = fc1_wT[0:8, :]
    for t in range(3):
        for o in range(16):
            W[R_FC1 + 8 + t * 16 + o, 0:18] = fc1_wT[8 + o * 3 + t, :]
    W[R_BIAS + 3, 0:18] = fc1_b

    # --- fc2 / fc3 (+ softmax lane padding with -1e30 in the fc3 bias row).
    W[R_FC2:R_FC2 + 18, 0:9] = fc2_w.T
    W[R_BIAS + 4, 0:9] = fc2_b
    W[R_FC3:R_FC3 + 9, 0:2] = fc3_w.T
    W[R_BIAS + 5, 0:2] = fc3_b
    W[R_BIAS + 5, 2:] = -1e30

    return dict(weights=jnp.asarray(W))


# ----------------------------------------------------------------------------
# Wrapper: 2 operands in (packed input + packed weights), lane-dense output.
# ----------------------------------------------------------------------------
def _net_forward(x, params):
    x0 = x[0].astype(jnp.float32)                          # (140,), only x[0] is consumed
    xq_row = jnp.pad(x0[:64], (0, 64))                     # (128,) quantum segments
    x4_row = jnp.pad(x0[64:140], (0, 52))                  # (128,) classical segment
    X = jnp.stack([xq_row, x4_row], axis=0)                # (2, 128)

    vmem = pl.BlockSpec(memory_space=pltpu.MemorySpace.VMEM)
    out = pl.pallas_call(
        net_kernel,
        out_shape=jax.ShapeDtypeStruct((1, LANES), jnp.float32),
        in_specs=[vmem, vmem],
        out_specs=vmem,
    )(X, params["weights"])
    return out[:, :2]                                      # softmax probs


net_forward = jax.jit(_net_forward)


if __name__ == "__main__":
    params = init_params()
    key = jax.random.PRNGKey(0)
    x = jax.random.normal(key, (1, 140), jnp.float32)      # batch=1, 140 features

    out = net_forward(x, params)
    out = jax.block_until_ready(out)
    out_np = np.asarray(out)

    assert out_np.shape == (1, 2)
    assert np.all(np.isfinite(out_np))
    assert abs(float(out_np.sum()) - 1.0) < 1e-4            # softmax sanity
    print("KERNEL_OK")
</pallas_src>

<mosaic_0001>
module attributes {stable_mosaic.version = 11 : i64} {
  func.func @net_kernel(%arg0: memref<2x128xf32, #tpu.memory_space<vmem>>, %arg1: memref<1288x128xf32, #tpu.memory_space<vmem>>, %arg2: memref<1x128xf32, #tpu.memory_space<vmem>>) attributes {dimension_semantics = [], scalar_prefetch = 0 : i64, scratch_operands = 0 : i64, tpu.core_type = #tpu.core_type<tc>} {
    %c0 = arith.constant 0 : index
    %c0_0 = arith.constant 0 : index
    %0 = vector.load %arg0[%c0, %c0_0] : memref<2x128xf32, #tpu.memory_space<vmem>>, vector<1x128xf32>
    %c1 = arith.constant 1 : index
    %c0_1 = arith.constant 0 : index
    %1 = vector.load %arg0[%c1, %c0_1] : memref<2x128xf32, #tpu.memory_space<vmem>>, vector<1x128xf32>
    %c0_2 = arith.constant 0 : index
    %c0_3 = arith.constant 0 : index
    %2 = vector.load %arg1[%c0_2, %c0_3] : memref<1288x128xf32, #tpu.memory_space<vmem>>, vector<128x128xf32>
    %cst = arith.constant dense<0.000000e+00> : vector<1x128xf32>
    %3 = tpu.matmul %0, %2, %cst {dimension_numbers = #tpu.dot_dimension_numbers<[1], [0], [0], [1], [0, 0, 1, 1], [], []>} : vector<1x128xf32>, vector<128x128xf32>, vector<1x128xf32> -> vector<1x128xf32>
    %4 = arith.mulf %3, %3 : vector<1x128xf32>
    %c640 = arith.constant 640 : index
    %c0_4 = arith.constant 0 : index
    %5 = vector.load %arg1[%c640, %c0_4] : memref<1288x128xf32, #tpu.memory_space<vmem>>, vector<128x128xf32>
    %cst_5 = arith.constant dense<0.000000e+00> : vector<1x128xf32>
    %6 = tpu.matmul %4, %5, %cst_5 {dimension_numbers = #tpu.dot_dimension_numbers<[1], [0], [0], [1], [0, 0, 1, 1], [], []>} : vector<1x128xf32>, vector<128x128xf32>, vector<1x128xf32> -> vector<1x128xf32>
    %c768 = arith.constant 768 : index
    %c0_6 = arith.constant 0 : index
    %7 = vector.load %arg1[%c768, %c0_6] : memref<1288x128xf32, #tpu.memory_space<vmem>>, vector<128x128xf32>
    %cst_7 = arith.constant dense<0.000000e+00> : vector<1x128xf32>
    %8 = tpu.matmul %4, %7, %cst_7 {dimension_numbers = #tpu.dot_dimension_numbers<[1], [0], [0], [1], [0, 0, 1, 1], [], []>} : vector<1x128xf32>, vector<128x128xf32>, vector<1x128xf32> -> vector<1x128xf32>
    %cst_8 = arith.constant 1.000000e-30 : f32
    %9 = vector.broadcast %cst_8 : f32 to vector<1x128xf32>
    %10 = arith.maximumf %8, %9 : vector<1x128xf32>
    %11 = tpu.reciprocal %10 : vector<1x128xf32> -> vector<1x128xf32>
    %12 = arith.mulf %6, %11 : vector<1x128xf32>
    %c128 = arith.constant 128 : index
    %c0_9 = arith.constant 0 : index
    %13 = vector.load %arg1[%c128, %c0_9] : memref<1288x128xf32, #tpu.memory_space<vmem>>, vector<128x128xf32>
    %cst_10 = arith.constant dense<0.000000e+00> : vector<1x128xf32>
    %14 = tpu.matmul %1, %13, %cst_10 {dimension_numbers = #tpu.dot_dimension_numbers<[1], [0], [0], [1], [0, 0, 1, 1], [], []>} : vector<1x128xf32>, vector<128x128xf32>, vector<1x128xf32> -> vector<1x128xf32>
    %c1280 = arith.constant 1280 : index
    %c0_11 = arith.constant 0 : index
    %15 = vector.load %arg1[%c1280, %c0_11] : memref<1288x128xf32, #tpu.memory_space<vmem>>, vector<1x128xf32>
    %16 = arith.addf %14, %15 : vector<1x128xf32>
    %17 = math.tanh %16 : vector<1x128xf32>
    %c256 = arith.constant 256 : index
    %c0_12 = arith.constant 0 : index
    %18 = vector.load %arg1[%c256, %c0_12] : memref<1288x128xf32, #tpu.memory_space<vmem>>, vector<128x128xf32>
    %cst_13 = arith.constant dense<0.000000e+00> : vector<1x128xf32>
    %19 = tpu.matmul %1, %18, %cst_13 {dimension_numbers = #tpu.dot_dimension_numbers<[1], [0], [0], [1], [0, 0, 1, 1], [], []>} : vector<1x128xf32>, vector<128x128xf32>, vector<1x128xf32> -> vector<1x128xf32>
    %c1281 = arith.constant 1281 : index
    %c0_14 = arith.constant 0 : index
    %20 = vector.load %arg1[%c1281, %c0_14] : memref<1288x128xf32, #tpu.memory_space<vmem>>, vector<1x128xf32>
    %21 = arith.addf %19, %20 : vector<1x128xf32>
    %22 = math.tanh %21 : vector<1x128xf32>
    %c384 = arith.constant 384 : index
    %c0_15 = arith.constant 0 : index
    %23 = vector.load %arg1[%c384, %c0_15] : memref<1288x128xf32, #tpu.memory_space<vmem>>, vector<128x128xf32>
    %cst_16 = arith.constant dense<0.000000e+00> : vector<1x128xf32>
    %24 = tpu.matmul %17, %23, %cst_16 {dimension_numbers = #tpu.dot_dimension_numbers<[1], [0], [0], [1], [0, 0, 1, 1], [], []>} : vector<1x128xf32>, vector<128x128xf32>, vector<1x128xf32> -> vector<1x128xf32>
    %c512 = arith.constant 512 : index
    %c0_17 = arith.constant 0 : index
    %25 = vector.load %arg1[%c512, %c0_17] : memref<1288x128xf32, #tpu.memory_space<vmem>>, vector<128x128xf32>
    %cst_18 = arith.constant dense<0.000000e+00> : vector<1x128xf32>
    %26 = tpu.matmul %22, %25, %cst_18 {dimension_numbers = #tpu.dot_dimension_numbers<[1], [0], [0], [1], [0, 0, 1, 1], [], []>} : vector<1x128xf32>, vector<128x128xf32>, vector<1x128xf32> -> vector<1x128xf32>
    %27 = arith.addf %24, %26 : vector<1x128xf32>
    %c1282 = arith.constant 1282 : index
    %c0_19 = arith.constant 0 : index
    %28 = vector.load %arg1[%c1282, %c0_19] : memref<1288x128xf32, #tpu.memory_space<vmem>>, vector<1x128xf32>
    %29 = arith.addf %27, %28 : vector<1x128xf32>
    %30 = math.tanh %29 : vector<1x128xf32>
    %31 = arith.addf %12, %30 : vector<1x128xf32>
    %c896 = arith.constant 896 : index
    %c0_20 = arith.constant 0 : index
    %32 = vector.load %arg1[%c896, %c0_20] : memref<1288x128xf32, #tpu.memory_space<vmem>>, vector<128x128xf32>
    %cst_21 = arith.constant dense<0.000000e+00> : vector<1x128xf32>
    %33 = tpu.matmul %31, %32, %cst_21 {dimension_numbers = #tpu.dot_dimension_numbers<[1], [0], [0], [1], [0, 0, 1, 1], [], []>} : vector<1x128xf32>, vector<128x128xf32>, vector<1x128xf32> -> vector<1x128xf32>
    %c1283 = arith.constant 1283 : index
    %c0_22 = arith.constant 0 : index
    %34 = vector.load %arg1[%c1283, %c0_22] : memref<1288x128xf32, #tpu.memory_space<vmem>>, vector<1x128xf32>
    %35 = arith.addf %33, %34 : vector<1x128xf32>
    %36 = math.tanh %35 : vector<1x128xf32>
    %c1024 = arith.constant 1024 : index
    %c0_23 = arith.constant 0 : index
    %37 = vector.load %arg1[%c1024, %c0_23] : memref<1288x128xf32, #tpu.memory_space<vmem>>, vector<128x128xf32>
    %cst_24 = arith.constant dense<0.000000e+00> : vector<1x128xf32>
    %38 = tpu.matmul %36, %37, %cst_24 {dimension_numbers = #tpu.dot_dimension_numbers<[1], [0], [0], [1], [0, 0, 1, 1], [], []>} : vector<1x128xf32>, vector<128x128xf32>, vector<1x128xf32> -> vector<1x128xf32>
    %c1284 = arith.constant 1284 : index
    %c0_25 = arith.constant 0 : index
    %39 = vector.load %arg1[%c1284, %c0_25] : memref<1288x128xf32, #tpu.memory_space<vmem>>, vector<1x128xf32>
    %40 = arith.addf %38, %39 : vector<1x128xf32>
    %41 = math.tanh %40 : vector<1x128xf32>
    %c1152 = arith.constant 1152 : index
    %c0_26 = arith.constant 0 : index
    %42 = vector.load %arg1[%c1152, %c0_26] : memref<1288x128xf32, #tpu.memory_space<vmem>>, vector<128x128xf32>
    %cst_27 = arith.constant dense<0.000000e+00> : vector<1x128xf32>
    %43 = tpu.matmul %41, %42, %cst_27 {dimension_numbers = #tpu.dot_dimension_numbers<[1], [0], [0], [1], [0, 0, 1, 1], [], []>} : vector<1x128xf32>, vector<128x128xf32>, vector<1x128xf32> -> vector<1x128xf32>
    %c1285 = arith.constant 1285 : index
    %c0_28 = arith.constant 0 : index
    %44 = vector.load %arg1[%c1285, %c0_28] : memref<1288x128xf32, #tpu.memory_space<vmem>>, vector<1x128xf32>
    %45 = arith.addf %43, %44 : vector<1x128xf32>
    %cst_29 = arith.constant dense<0xFF800000> : vector<1xf32>
    %46 = vector.multi_reduction <maximumf>, %45, %cst_29 [1] : vector<1x128xf32> to vector<1xf32>
    %47 = vector.shape_cast %46 : vector<1xf32> to vector<1x1xf32>
    %48 = vector.broadcast %47 : vector<1x1xf32> to vector<1x128xf32>
    %49 = arith.subf %45, %48 : vector<1x128xf32>
    %50 = math.exp %49 : vector<1x128xf32>
    %cst_30 = arith.constant dense<0.000000e+00> : vector<1xf32>
    %51 = vector.multi_reduction <add>, %50, %cst_30 [1] : vector<1x128xf32> to vector<1xf32>
    %52 = vector.shape_cast %51 : vector<1xf32> to vector<1x1xf32>
    %53 = tpu.reciprocal %52 : vector<1x1xf32> -> vector<1x1xf32>
    %54 = vector.broadcast %53 : vector<1x1xf32> to vector<1x128xf32>
    %55 = arith.mulf %50, %54 : vector<1x128xf32>
    %c0_31 = arith.constant 0 : index
    %c0_32 = arith.constant 0 : index
    %56 = vector.load %arg2[%c0_31, %c0_32] : memref<1x128xf32, #tpu.memory_space<vmem>>, vector<1x128xf32>
    tpu.vector_store %arg2[%c0_31, %c0_32], %55 {strides = array<i32>} : memref<1x128xf32, #tpu.memory_space<vmem>>, vector<1x128xf32>,
    return
  }
}

</mosaic_0001>

<llo_original>
// kernel: _net_forward.1
$region0: #{_net_forward.1}
  #allocation0 [shape = 'u32[]', space=smem, size = 0x4, offset = 0x4, fixed_abs, tag = 'smem constant byte address 0x4 - core index']
  #allocation1 [shape = 'u32[144,128]{1,0:T(1,128)}', space=vmem, size = 0x12000, scoped, tag = 'internal scratch']
  %s0 = inlined_call_operand.vmem [shape: f32[2,128], index: 0, kind: input, shape index: {}]
  %s1 = inlined_call_operand.hbm [shape: f32[1288,128], index: 1, kind: input, shape index: {}]
  %s2 = inlined_call_operand.hbm [shape: f32[1,128], index: 2, kind: output, shape index: {}]
  %s3 = sld [smem:[#allocation0]]
  $region22: #{_net_forward.1} parent=0
    _
  %s5 = ssub.s32 1, %s3
  %s6 = scalar_select 0, %s5, %s3
  $region1: #{_net_forward.1} parent=0
    #allocation2 [shape = 'u8[659456]{0}', space=vmem, size = 0xa1000, scoped, tag = 'input window, operand 1, single buffered']
    #allocation3 [shape = 's32[1]{0}', space=sflag, size = 0x4, scoped, tag = 'scoped memory for _net_forward.1']
    #allocation4 [shape = 's32[1]{0}', space=sflag, size = 0x4, scoped, tag = 'scoped memory for _net_forward.1']
    #allocation5 [shape = 'u8[512]{0}', space=vmem, size = 0x400, scoped, tag = 'output window, operand 0, single buffered']
    %7 = vsyncpa [#allocation3], 0
    %8 = vsyncpa [#allocation4], 0
    // Predicated region
    $region2: #{_net_forward.1} parent=1 // pred_check
      _
    $region3: #{_net_forward.1} parent=1 // pred_check_branch
      %10 = sbr.rel (0) target = $region5
    $region4: #{_net_forward.1} parent=1 // pred_region
      _
    $region5: #{_net_forward.1} parent=1 // pred_fallthru
      _
    // Predicated region
    $region6: #{_net_forward.1} parent=1 // pred_check
      _
    $region7: #{_net_forward.1} parent=1 // pred_check_branch
      %12 = sbr.rel (0) target = $region9
    $region8: #{_net_forward.1} parent=1 // pred_region
      %s14 = ssub.s32 20608, 20608
      %15 = vsyncadd [#allocation3], %s14
      %s16 = sshll.u32 [#allocation2], 4
      %s17 = int_to_ptr.vmem [resolvable:$true] %s16
      %22 = dma.hbm_to_vmem [thread:$0]  %s1, 20608, %s17, [#allocation3], 128, 128, 8
    $region9: #{_net_forward.1} parent=1 // pred_fallthru
      _
    // Predicated region
    $region10: #{_net_forward.1} parent=1 // pred_check
      _
    $region11: #{_net_forward.1} parent=1 // pred_check_branch
      %24 = sbr.rel (0) target = $region13
    $region12: #{_net_forward.1} parent=1 // pred_region
      %25 = dma.done [#allocation3], 20608
    $region13: #{_net_forward.1} parent=1 // pred_fallthru
      _
    %v26 = vld [vmem:[%s0] sm:$0x1]
    %v27 = vld [vmem:[%s0 + $0x1] sm:$0x1]
    %v28 = vld [vmem:[#allocation2] sm:$0xff]
    %v29 = vld [vmem:[#allocation2 + $0x8] sm:$0xff]
    %v30 = vld [vmem:[#allocation2 + $0x10] sm:$0xff]
    %v31 = vld [vmem:[#allocation2 + $0x18] sm:$0xff]
    %v32 = vld [vmem:[#allocation2 + $0x20] sm:$0xff]
    %v33 = vld [vmem:[#allocation2 + $0x28] sm:$0xff]
    %v34 = vld [vmem:[#allocation2 + $0x30] sm:$0xff]
    %v35 = vld [vmem:[#allocation2 + $0x38] sm:$0xff]
    %v36 = vld [vmem:[#allocation2 + $0x40] sm:$0xff]
    %v37 = vld [vmem:[#allocation2 + $0x48] sm:$0xff]
    %v38 = vld [vmem:[#allocation2 + $0x50] sm:$0xff]
    %v39 = vld [vmem:[#allocation2 + $0x58] sm:$0xff]
    %v40 = vld [vmem:[#allocation2 + $0x60] sm:$0xff]
    %v41 = vld [vmem:[#allocation2 + $0x68] sm:$0xff]
    %v42 = vld [vmem:[#allocation2 + $0x70] sm:$0xff]
    %v43 = vld [vmem:[#allocation2 + $0x78] sm:$0xff]
    %44 = vmatprep.subr.mxu0 0.0
    %45 = vmatpush1.msra.mxu0 %v28
    %46 = vmatprep.subr.mxu0 0.0
    %47 = vmatpush1.msra.mxu0 %v29
    %48 = vmatprep.subr.mxu0 0.0
    %49 = vmatpush1.msra.mxu0 %v30
    %50 = vmatprep.subr.mxu0 0.0
    %51 = vmatpush1.msra.mxu0 %v31
    %52 = vmatprep.subr.mxu0 0.0
    %53 = vmatpush1.msra.mxu0 %v32
    %54 = vmatprep.subr.mxu0 0.0
    %55 = vmatpush1.msra.mxu0 %v33
    %56 = vmatprep.subr.mxu0 0.0
    %57 = vmatpush1.msra.mxu0 %v34
    %58 = vmatprep.subr.mxu0 0.0
    %59 = vmatpush1.msra.mxu0 %v35
    %60 = vmatprep.subr.mxu0 0.0
    %61 = vmatpush1.msra.mxu0 %v36
    %62 = vmatprep.subr.mxu0 0.0
    %63 = vmatpush1.msra.mxu0 %v37
    %64 = vmatprep.subr.mxu0 0.0
    %65 = vmatpush1.msra.mxu0 %v38
    %66 = vmatprep.subr.mxu0 0.0
    %67 = vmatpush1.msra.mxu0 %v39
    %68 = vmatprep.subr.mxu0 0.0
    %69 = vmatpush1.msra.mxu0 %v40
    %70 = vmatprep.subr.mxu0 0.0
    %71 = vmatpush1.msra.mxu0 %v41
    %72 = vmatprep.subr.mxu0 0.0
    %73 = vmatpush1.msra.mxu0 %v42
    %74 = vmatprep.subr.mxu0 0.0
    %75 = vmatpush1.msra.mxu0 %v43
    %76 = vmatprep.subr.mxu0 0.0
    %77 = vmatpush1.msra.mxu0 0.0
    %78 = vmatprep.subr.mxu0 0.0
    %79 = vmatpush1.msra.mxu0 0.0
    %80 = vmatprep.subr.mxu0 0.0
    %81 = vmatpush1.msra.mxu0 0.0
    %82 = vmatprep.subr.mxu0 0.0
    %83 = vmatpush1.msra.mxu0 0.0
    %84 = vmatprep.subr.mxu0 0.0
    %85 = vmatpush1.msra.mxu0 0.0
    %86 = vmatprep.subr.mxu0 0.0
    %87 = vmatpush1.msra.mxu0 0.0
    %88 = vmatprep.subr.mxu0 0.0
    %89 = vmatpush1.msra.mxu0 0.0
    %90 = vmatprep.subr.mxu0 0.0
    %91 = vmatpush1.msra.mxu0 0.0
    %92 = vmatprep.subr.mxu0 0.0
    %93 = vmatpush1.msra.mxu0 0.0
    %94 = vmatprep.subr.mxu0 0.0
    %95 = vmatpush1.msra.mxu0 0.0
    %96 = vmatprep.subr.mxu0 0.0
    %97 = vmatpush1.msra.mxu0 0.0
    %98 = vmatprep.subr.mxu0 0.0
    %99 = vmatpush1.msra.mxu0 0.0
    %100 = vmatprep.subr.mxu0 0.0
    %101 = vmatpush1.msra.mxu0 0.0
    %102 = vmatprep.subr.mxu0 0.0
    %103 = vmatpush1.msra.mxu0 0.0
    %104 = vmatprep.subr.mxu0 0.0
    %105 = vmatpush1.msra.mxu0 0.0
    %106 = vmatprep.subr.mxu0 0.0
    %107 = vmatpush1.msra.mxu0 0.0
    %108 = vmatprep.mubr.f32.mxu0 0.0
    %109 = vmatmul.mubr.f32.gmra.mrb[0].mxu0 %v26
    %v110 = vpop.f32.mrb[0].mxu0
    %v111 = vadd.f32 0.0, %v110
    %v112 = vpop.f32.mrb[0].mxu0
    %113 = vdwg.mxu0
    %v114 = vmul.f32 %v111, %v111
    %v115 = vld [vmem:[#allocation2 + $0x280] sm:$0xff]
    %v116 = vld [vmem:[#allocation2 + $0x288] sm:$0xff]
    %v117 = vld [vmem:[#allocation2 + $0x290] sm:$0xff]
    %v118 = vld [vmem:[#allocation2 + $0x298] sm:$0xff]
    %v119 = vld [vmem:[#allocation2 + $0x2a0] sm:$0xff]
    %v120 = vld [vmem:[#allocation2 + $0x2a8] sm:$0xff]
    %v121 = vld [vmem:[#allocation2 + $0x2b0] sm:$0xff]
    %v122 = vld [vmem:[#allocation2 + $0x2b8] sm:$0xff]
    %v123 = vld [vmem:[#allocation2 + $0x2c0] sm:$0xff]
    %v124 = vld [vmem:[#allocation2 + $0x2c8] sm:$0xff]
    %v125 = vld [vmem:[#allocation2 + $0x2d0] sm:$0xff]
    %v126 = vld [vmem:[#allocation2 + $0x2d8] sm:$0xff]
    %v127 = vld [vmem:[#allocation2 + $0x2e0] sm:$0xff]
    %v128 = vld [vmem:[#allocation2 + $0x2e8] sm:$0xff]
    %v129 = vld [vmem:[#allocation2 + $0x2f0] sm:$0xff]
    %v130 = vld [vmem:[#allocation2 + $0x2f8] sm:$0xff]
    %131 = vmatprep.subr.mxu0 0.0
    %132 = vmatpush1.msra.mxu0 %v115
    %133 = vmatprep.subr.mxu0 0.0
    %134 = vmatpush1.msra.mxu0 %v116
    %135 = vmatprep.subr.mxu0 0.0
    %136 = vmatpush1.msra.mxu0 %v117
    %137 = vmatprep.subr.mxu0 0.0
    %138 = vmatpush1.msra.mxu0 %v118
    %139 = vmatprep.subr.mxu0 0.0
    %140 = vmatpush1.msra.mxu0 %v119
    %141 = vmatprep.subr.mxu0 0.0
    %142 = vmatpush1.msra.mxu0 %v120
    %143 = vmatprep.subr.mxu0 0.0
    %144 = vmatpush1.msra.mxu0 %v121
    %145 = vmatprep.subr.mxu0 0.0
    %146 = vmatpush1.msra.mxu0 %v122
    %147 = vmatprep.subr.mxu0 0.0
    %148 = vmatpush1.msra.mxu0 %v123
    %149 = vmatprep.subr.mxu0 0.0
    %150 = vmatpush1.msra.mxu0 %v124
    %151 = vmatprep.subr.mxu0 0.0
    %152 = vmatpush1.msra.mxu0 %v125
    %153 = vmatprep.subr.mxu0 0.0
    %154 = vmatpush1.msra.mxu0 %v126
    %155 = vmatprep.subr.mxu0 0.0
    %156 = vmatpush1.msra.mxu0 %v127
    %157 = vmatprep.subr.mxu0 0.0
    %158 = vmatpush1.msra.mxu0 %v128
    %159 = vmatprep.subr.mxu0 0.0
    %160 = vmatpush1.msra.mxu0 %v129
    %161 = vmatprep.subr.mxu0 0.0
    %162 = vmatpush1.msra.mxu0 %v130
    %163 = vmatprep.subr.mxu0 0.0
    %164 = vmatpush1.msra.mxu0 0.0
    %165 = vmatprep.subr.mxu0 0.0
    %166 = vmatpush1.msra.mxu0 0.0
    %167 = vmatprep.subr.mxu0 0.0
    %168 = vmatpush1.msra.mxu0 0.0
    %169 = vmatprep.subr.mxu0 0.0
    %170 = vmatpush1.msra.mxu0 0.0
    %171 = vmatprep.subr.mxu0 0.0
    %172 = vmatpush1.msra.mxu0 0.0
    %173 = vmatprep.subr.mxu0 0.0
    %174 = vmatpush1.msra.mxu0 0.0
    %175 = vmatprep.subr.mxu0 0.0
    %176 = vmatpush1.msra.mxu0 0.0
    %177 = vmatprep.subr.mxu0 0.0
    %178 = vmatpush1.msra.mxu0 0.0
    %179 = vmatprep.subr.mxu0 0.0
    %180 = vmatpush1.msra.mxu0 0.0
    %181 = vmatprep.subr.mxu0 0.0
    %182 = vmatpush1.msra.mxu0 0.0
    %183 = vmatprep.subr.mxu0 0.0
    %184 = vmatpush1.msra.mxu0 0.0
    %185 = vmatprep.subr.mxu0 0.0
    %186 = vmatpush1.msra.mxu0 0.0
    %187 = vmatprep.subr.mxu0 0.0
    %188 = vmatpush1.msra.mxu0 0.0
    %189 = vmatprep.subr.mxu0 0.0
    %190 = vmatpush1.msra.mxu0 0.0
    %191 = vmatprep.subr.mxu0 0.0
    %192 = vmatpush1.msra.mxu0 0.0
    %193 = vmatprep.subr.mxu0 0.0
    %194 = vmatpush1.msra.mxu0 0.0
    %195 = vmatprep.mubr.f32.mxu0 0.0
    %196 = vmatmul.mubr.f32.gmra.mrb[0].mxu0 %v114
    %v197 = vpop.f32.mrb[0].mxu0
    %v198 = vadd.f32 0.0, %v197
    %v199 = vpop.f32.mrb[0].mxu0
    %200 = vdwg.mxu0
    %v201 = vld [vmem:[#allocation2 + $0x300] sm:$0xff]
    %v202 = vld [vmem:[#allocation2 + $0x308] sm:$0xff]
    %v203 = vld [vmem:[#allocation2 + $0x310] sm:$0xff]
    %v204 = vld [vmem:[#allocation2 + $0x318] sm:$0xff]
    %v205 = vld [vmem:[#allocation2 + $0x320] sm:$0xff]
    %v206 = vld [vmem:[#allocation2 + $0x328] sm:$0xff]
    %v207 = vld [vmem:[#allocation2 + $0x330] sm:$0xff]
    %v208 = vld [vmem:[#allocation2 + $0x338] sm:$0xff]
    %v209 = vld [vmem:[#allocation2 + $0x340] sm:$0xff]
    %v210 = vld [vmem:[#allocation2 + $0x348] sm:$0xff]
    %v211 = vld [vmem:[#allocation2 + $0x350] sm:$0xff]
    %v212 = vld [vmem:[#allocation2 + $0x358] sm:$0xff]
    %v213 = vld [vmem:[#allocation2 + $0x360] sm:$0xff]
    %v214 = vld [vmem:[#allocation2 + $0x368] sm:$0xff]
    %v215 = vld [vmem:[#allocation2 + $0x370] sm:$0xff]
    %v216 = vld [vmem:[#allocation2 + $0x378] sm:$0xff]
    %217 = vmatprep.subr.mxu0 0.0
    %218 = vmatpush1.msra.mxu0 %v201
    %219 = vmatprep.subr.mxu0 0.0
    %220 = vmatpush1.msra.mxu0 %v202
    %221 = vmatprep.subr.mxu0 0.0
    %222 = vmatpush1.msra.mxu0 %v203
    %223 = vmatprep.subr.mxu0 0.0
    %224 = vmatpush1.msra.mxu0 %v204
    %225 = vmatprep.subr.mxu0 0.0
    %226 = vmatpush1.msra.mxu0 %v205
    %227 = vmatprep.subr.mxu0 0.0
    %228 = vmatpush1.msra.mxu0 %v206
    %229 = vmatprep.subr.mxu0 0.0
    %230 = vmatpush1.msra.mxu0 %v207
    %231 = vmatprep.subr.mxu0 0.0
    %232 = vmatpush1.msra.mxu0 %v208
    %233 = vmatprep.subr.mxu0 0.0
    %234 = vmatpush1.msra.mxu0 %v209
    %235 = vmatprep.subr.mxu0 0.0
    %236 = vmatpush1.msra.mxu0 %v210
    %237 = vmatprep.subr.mxu0 0.0
    %238 = vmatpush1.msra.mxu0 %v211
    %239 = vmatprep.subr.mxu0 0.0
    %240 = vmatpush1.msra.mxu0 %v212
    %241 = vmatprep.subr.mxu0 0.0
    %242 = vmatpush1.msra.mxu0 %v213
    %243 = vmatprep.subr.mxu0 0.0
    %244 = vmatpush1.msra.mxu0 %v214
    %245 = vmatprep.subr.mxu0 0.0
    %246 = vmatpush1.msra.mxu0 %v215
    %247 = vmatprep.subr.mxu0 0.0
    %248 = vmatpush1.msra.mxu0 %v216
    %249 = vmatprep.subr.mxu0 0.0
    %250 = vmatpush1.msra.mxu0 0.0
    %251 = vmatprep.subr.mxu0 0.0
    %252 = vmatpush1.msra.mxu0 0.0
    %253 = vmatprep.subr.mxu0 0.0
    %254 = vmatpush1.msra.mxu0 0.0
    %255 = vmatprep.subr.mxu0 0.0
    %256 = vmatpush1.msra.mxu0 0.0
    %257 = vmatprep.subr.mxu0 0.0
    %258 = vmatpush1.msra.mxu0 0.0
    %259 = vmatprep.subr.mxu0 0.0
    %260 = vmatpush1.msra.mxu0 0.0
    %261 = vmatprep.subr.mxu0 0.0
    %262 = vmatpush1.msra.mxu0 0.0
    %263 = vmatprep.subr.mxu0 0.0
    %264 = vmatpush1.msra.mxu0 0.0
    %265 = vmatprep.subr.mxu0 0.0
    %266 = vmatpush1.msra.mxu0 0.0
    %267 = vmatprep.subr.mxu0 0.0
    %268 = vmatpush1.msra.mxu0 0.0
    %269 = vmatprep.subr.mxu0 0.0
    %270 = vmatpush1.msra.mxu0 0.0
    %271 = vmatprep.subr.mxu0 0.0
    %272 = vmatpush1.msra.mxu0 0.0
    %273 = vmatprep.subr.mxu0 0.0
    %274 = vmatpush1.msra.mxu0 0.0
    %275 = vmatprep.subr.mxu0 0.0
    %276 = vmatpush1.msra.mxu0 0.0
    %277 = vmatprep.subr.mxu0 0.0
    %278 = vmatpush1.msra.mxu0 0.0
    %279 = vmatprep.subr.mxu0 0.0
    %280 = vmatpush1.msra.mxu0 0.0
    %281 = vmatprep.mubr.f32.mxu0 0.0
    %282 = vmatmul.mubr.f32.gmra.mrb[0].mxu0 %v114
    %v283 = vpop.f32.mrb[0].mxu0
    %v284 = vadd.f32 0.0, %v283
    %v285 = vpop.f32.mrb[0].mxu0
    %286 = vdwg.mxu0
    %v287 = vmax.f32 %v284, 1e-30
    %v288 = vrcp.pop %v287
    %v289 = vmul.f32 %v198, %v288
    %v290 = vld [vmem:[#allocation2 + $0x80] sm:$0xff]
    %v291 = vld [vmem:[#allocation2 + $0x88] sm:$0xff]
    %v292 = vld [vmem:[#allocation2 + $0x90] sm:$0xff]
    %v293 = vld [vmem:[#allocation2 + $0x98] sm:$0xff]
    %v294 = vld [vmem:[#allocation2 + $0xa0] sm:$0xff]
    %v295 = vld [vmem:[#allocation2 + $0xa8] sm:$0xff]
    %v296 = vld [vmem:[#allocation2 + $0xb0] sm:$0xff]
    %v297 = vld [vmem:[#allocation2 + $0xb8] sm:$0xff]
    %v298 = vld [vmem:[#allocation2 + $0xc0] sm:$0xff]
    %v299 = vld [vmem:[#allocation2 + $0xc8] sm:$0xff]
    %v300 = vld [vmem:[#allocation2 + $0xd0] sm:$0xff]
    %v301 = vld [vmem:[#allocation2 + $0xd8] sm:$0xff]
    %v302 = vld [vmem:[#allocation2 + $0xe0] sm:$0xff]
    %v303 = vld [vmem:[#allocation2 + $0xe8] sm:$0xff]
    %v304 = vld [vmem:[#allocation2 + $0xf0] sm:$0xff]
    %v305 = vld [vmem:[#allocation2 + $0xf8] sm:$0xff]
    %v306 = vld [vmem:[#allocation2 + $0x500] sm:$0x1]
    %307 = vmatprep.subr.mxu0 0.0
    %308 = vmatpush1.msra.mxu0 %v290
    %309 = vmatprep.subr.mxu0 0.0
    %310 = vmatpush1.msra.mxu0 %v291
    %311 = vmatprep.subr.mxu0 0.0
    %312 = vmatpush1.msra.mxu0 %v292
    %313 = vmatprep.subr.mxu0 0.0
    %314 = vmatpush1.msra.mxu0 %v293
    %315 = vmatprep.subr.mxu0 0.0
    %316 = vmatpush1.msra.mxu0 %v294
    %317 = vmatprep.subr.mxu0 0.0
    %318 = vmatpush1.msra.mxu0 %v295
    %319 = vmatprep.subr.mxu0 0.0
    %320 = vmatpush1.msra.mxu0 %v296
    %321 = vmatprep.subr.mxu0 0.0
    %322 = vmatpush1.msra.mxu0 %v297
    %323 = vmatprep.subr.mxu0 0.0
    %324 = vmatpush1.msra.mxu0 %v298
    %325 = vmatprep.subr.mxu0 0.0
    %326 = vmatpush1.msra.mxu0 %v299
    %327 = vmatprep.subr.mxu0 0.0
    %328 = vmatpush1.msra.mxu0 %v300
    %329 = vmatprep.subr.mxu0 0.0
    %330 = vmatpush1.msra.mxu0 %v301
    %331 = vmatprep.subr.mxu0 0.0
    %332 = vmatpush1.msra.mxu0 %v302
    %333 = vmatprep.subr.mxu0 0.0
    %334 = vmatpush1.msra.mxu0 %v303
    %335 = vmatprep.subr.mxu0 0.0
    %336 = vmatpush1.msra.mxu0 %v304
    %337 = vmatprep.subr.mxu0 0.0
    %338 = vmatpush1.msra.mxu0 %v305
    %339 = vmatprep.subr.mxu0 0.0
    %340 = vmatpush1.msra.mxu0 0.0
    %341 = vmatprep.subr.mxu0 0.0
    %342 = vmatpush1.msra.mxu0 0.0
    %343 = vmatprep.subr.mxu0 0.0
    %344 = vmatpush1.msra.mxu0 0.0
    %345 = vmatprep.subr.mxu0 0.0
    %346 = vmatpush1.msra.mxu0 0.0
    %347 = vmatprep.subr.mxu0 0.0
    %348 = vmatpush1.msra.mxu0 0.0
    %349 = vmatprep.subr.mxu0 0.0
    %350 = vmatpush1.msra.mxu0 0.0
    %351 = vmatprep.subr.mxu0 0.0
    %352 = vmatpush1.msra.mxu0 0.0
    %353 = vmatprep.subr.mxu0 0.0
    %354 = vmatpush1.msra.mxu0 0.0
    %355 = vmatprep.subr.mxu0 0.0
    %356 = vmatpush1.msra.mxu0 0.0
    %357 = vmatprep.subr.mxu0 0.0
    %358 = vmatpush1.msra.mxu0 0.0
    %359 = vmatprep.subr.mxu0 0.0
    %360 = vmatpush1.msra.mxu0 0.0
    %361 = vmatprep.subr.mxu0 0.0
    %362 = vmatpush1.msra.mxu0 0.0
    %363 = vmatprep.subr.mxu0 0.0
    %364 = vmatpush1.msra.mxu0 0.0
    %365 = vmatprep.subr.mxu0 0.0
    %366 = vmatpush1.msra.mxu0 0.0
    %367 = vmatprep.subr.mxu0 0.0
    %368 = vmatpush1.msra.mxu0 0.0
    %369 = vmatprep.subr.mxu0 0.0
    %370 = vmatpush1.msra.mxu0 0.0
    %371 = vmatprep.mubr.f32.mxu0 0.0
    %372 = vmatmul.mubr.f32.gmra.mrb[0].mxu0 %v27
    %v373 = vpop.f32.mrb[0].mxu0
    %v374 = vadd.f32 %v306, %v373
    %v375 = vpop.f32.mrb[0].mxu0
    %376 = vdwg.mxu0
    %v377 = vtanh.pop %v374
    %v378 = vld [vmem:[#allocation2 + $0x100] sm:$0xff]
    %v379 = vld [vmem:[#allocation2 + $0x108] sm:$0xff]
    %v380 = vld [vmem:[#allocation2 + $0x110] sm:$0xff]
    %v381 = vld [vmem:[#allocation2 + $0x118] sm:$0xff]
    %v382 = vld [vmem:[#allocation2 + $0x120] sm:$0xff]
    %v383 = vld [vmem:[#allocation2 + $0x128] sm:$0xff]
    %v384 = vld [vmem:[#allocation2 + $0x130] sm:$0xff]
    %v385 = vld [vmem:[#allocation2 + $0x138] sm:$0xff]
    %v386 = vld [vmem:[#allocation2 + $0x140] sm:$0xff]
    %v387 = vld [vmem:[#allocation2 + $0x148] sm:$0xff]
    %v388 = vld [vmem:[#allocation2 + $0x150] sm:$0xff]
    %v389 = vld [vmem:[#allocation2 + $0x158] sm:$0xff]
    %v390 = vld [vmem:[#allocation2 + $0x160] sm:$0xff]
    %v391 = vld [vmem:[#allocation2 + $0x168] sm:$0xff]
    %v392 = vld [vmem:[#allocation2 + $0x170] sm:$0xff]
    %v393 = vld [vmem:[#allocation2 + $0x178] sm:$0xff]
    %v394 = vld [vmem:[#allocation2 + $0x501] sm:$0x1]
    %395 = vmatprep.subr.mxu0 0.0
    %396 = vmatpush1.msra.mxu0 %v378
    %397 = vmatprep.subr.mxu0 0.0
    %398 = vmatpush1.msra.mxu0 %v379
    %399 = vmatprep.subr.mxu0 0.0
    %400 = vmatpush1.msra.mxu0 %v380
    %401 = vmatprep.subr.mxu0 0.0
    %402 = vmatpush1.msra.mxu0 %v381
    %403 = vmatprep.subr.mxu0 0.0
    %404 = vmatpush1.msra.mxu0 %v382
    %405 = vmatprep.subr.mxu0 0.0
    %406 = vmatpush1.msra.mxu0 %v383
    %407 = vmatprep.subr.mxu0 0.0
    %408 = vmatpush1.msra.mxu0 %v384
    %409 = vmatprep.subr.mxu0 0.0
    %410 = vmatpush1.msra.mxu0 %v385
    %411 = vmatprep.subr.mxu0 0.0
    %412 = vmatpush1.msra.mxu0 %v386
    %413 = vmatprep.subr.mxu0 0.0
    %414 = vmatpush1.msra.mxu0 %v387
    %415 = vmatprep.subr.mxu0 0.0
    %416 = vmatpush1.msra.mxu0 %v388
    %417 = vmatprep.subr.mxu0 0.0
    %418 = vmatpush1.msra.mxu0 %v389
    %419 = vmatprep.subr.mxu0 0.0
    %420 = vmatpush1.msra.mxu0 %v390
    %421 = vmatprep.subr.mxu0 0.0
    %422 = vmatpush1.msra.mxu0 %v391
    %423 = vmatprep.subr.mxu0 0.0
    %424 = vmatpush1.msra.mxu0 %v392
    %425 = vmatprep.subr.mxu0 0.0
    %426 = vmatpush1.msra.mxu0 %v393
    %427 = vmatprep.subr.mxu0 0.0
    %428 = vmatpush1.msra.mxu0 0.0
    %429 = vmatprep.subr.mxu0 0.0
    %430 = vmatpush1.msra.mxu0 0.0
    %431 = vmatprep.subr.mxu0 0.0
    %432 = vmatpush1.msra.mxu0 0.0
    %433 = vmatprep.subr.mxu0 0.0
    %434 = vmatpush1.msra.mxu0 0.0
    %435 = vmatprep.subr.mxu0 0.0
    %436 = vmatpush1.msra.mxu0 0.0
    %437 = vmatprep.subr.mxu0 0.0
    %438 = vmatpush1.msra.mxu0 0.0
    %439 = vmatprep.subr.mxu0 0.0
    %440 = vmatpush1.msra.mxu0 0.0
    %441 = vmatprep.subr.mxu0 0.0
    %442 = vmatpush1.msra.mxu0 0.0
    %443 = vmatprep.subr.mxu0 0.0
    %444 = vmatpush1.msra.mxu0 0.0
    %445 = vmatprep.subr.mxu0 0.0
    %446 = vmatpush1.msra.mxu0 0.0
    %447 = vmatprep.subr.mxu0 0.0
    %448 = vmatpush1.msra.mxu0 0.0
    %449 = vmatprep.subr.mxu0 0.0
    %450 = vmatpush1.msra.mxu0 0.0
    %451 = vmatprep.subr.mxu0 0.0
    %452 = vmatpush1.msra.mxu0 0.0
    %453 = vmatprep.subr.mxu0 0.0
    %454 = vmatpush1.msra.mxu0 0.0
    %455 = vmatprep.subr.mxu0 0.0
    %456 = vmatpush1.msra.mxu0 0.0
    %457 = vmatprep.subr.mxu0 0.0
    %458 = vmatpush1.msra.mxu0 0.0
    %459 = vmatprep.mubr.f32.mxu0 0.0
    %460 = vmatmul.mubr.f32.gmra.mrb[0].mxu0 %v27
    %v461 = vpop.f32.mrb[0].mxu0
    %v462 = vadd.f32 %v394, %v461
    %v463 = vpop.f32.mrb[0].mxu0
    %464 = vdwg.mxu0
    %v465 = vtanh.pop %v462
    %v466 = vld [vmem:[#allocation2 + $0x180] sm:$0xff]
    %v467 = vld [vmem:[#allocation2 + $0x188] sm:$0xff]
    %v468 = vld [vmem:[#allocation2 + $0x190] sm:$0xff]
    %v469 = vld [vmem:[#allocation2 + $0x198] sm:$0xff]
    %v470 = vld [vmem:[#allocation2 + $0x1a0] sm:$0xff]
    %v471 = vld [vmem:[#allocation2 + $0x1a8] sm:$0xff]
    %v472 = vld [vmem:[#allocation2 + $0x1b0] sm:$0xff]
    %v473 = vld [vmem:[#allocation2 + $0x1b8] sm:$0xff]
    %v474 = vld [vmem:[#allocation2 + $0x1c0] sm:$0xff]
    %v475 = vld [vmem:[#allocation2 + $0x1c8] sm:$0xff]
    %v476 = vld [vmem:[#allocation2 + $0x1d0] sm:$0xff]
    %v477 = vld [vmem:[#allocation2 + $0x1d8] sm:$0xff]
    %v478 = vld [vmem:[#allocation2 + $0x1e0] sm:$0xff]
    %v479 = vld [vmem:[#allocation2 + $0x1e8] sm:$0xff]
    %v480 = vld [vmem:[#allocation2 + $0x1f0] sm:$0xff]
    %v481 = vld [vmem:[#allocation2 + $0x1f8] sm:$0xff]
    %v482 = vld [vmem:[#allocation2 + $0x200] sm:$0xff]
    %v483 = vld [vmem:[#allocation2 + $0x208] sm:$0xff]
    %v484 = vld [vmem:[#allocation2 + $0x210] sm:$0xff]
    %v485 = vld [vmem:[#allocation2 + $0x218] sm:$0xff]
    %v486 = vld [vmem:[#allocation2 + $0x220] sm:$0xff]
    %v487 = vld [vmem:[#allocation2 + $0x228] sm:$0xff]
    %v488 = vld [vmem:[#allocation2 + $0x230] sm:$0xff]
    %v489 = vld [vmem:[#allocation2 + $0x238] sm:$0xff]
    %v490 = vld [vmem:[#allocation2 + $0x240] sm:$0xff]
    %v491 = vld [vmem:[#allocation2 + $0x248] sm:$0xff]
    %v492 = vld [vmem:[#allocation2 + $0x250] sm:$0xff]
    %v493 = vld [vmem:[#allocation2 + $0x258] sm:$0xff]
    %v494 = vld [vmem:[#allocation2 + $0x260] sm:$0xff]
    %v495 = vld [vmem:[#allocation2 + $0x268] sm:$0xff]
    %v496 = vld [vmem:[#allocation2 + $0x270] sm:$0xff]
    %v497 = vld [vmem:[#allocation2 + $0x278] sm:$0xff]
    %498 = vmatprep.subr.mxu0 0.0
    %499 = vmatpush1.msra.mxu0 %v482
    %500 = vmatprep.subr.mxu0 0.0
    %501 = vmatpush1.msra.mxu0 %v483
    %502 = vmatprep.subr.mxu0 0.0
    %503 = vmatpush1.msra.mxu0 %v484
    %504 = vmatprep.subr.mxu0 0.0
    %505 = vmatpush1.msra.mxu0 %v485
    %506 = vmatprep.subr.mxu0 0.0
    %507 = vmatpush1.msra.mxu0 %v486
    %508 = vmatprep.subr.mxu0 0.0
    %509 = vmatpush1.msra.mxu0 %v487
    %510 = vmatprep.subr.mxu0 0.0
    %511 = vmatpush1.msra.mxu0 %v488
    %512 = vmatprep.subr.mxu0 0.0
    %513 = vmatpush1.msra.mxu0 %v489
    %514 = vmatprep.subr.mxu0 0.0
    %515 = vmatpush1.msra.mxu0 %v490
    %516 = vmatprep.subr.mxu0 0.0
    %517 = vmatpush1.msra.mxu0 %v491
    %518 = vmatprep.subr.mxu0 0.0
    %519 = vmatpush1.msra.mxu0 %v492
    %520 = vmatprep.subr.mxu0 0.0
    %521 = vmatpush1.msra.mxu0 %v493
    %522 = vmatprep.subr.mxu0 0.0
    %523 = vmatpush1.msra.mxu0 %v494
    %524 = vmatprep.subr.mxu0 0.0
    %525 = vmatpush1.msra.mxu0 %v495
    %526 = vmatprep.subr.mxu0 0.0
    %527 = vmatpush1.msra.mxu0 %v496
    %528 = vmatprep.subr.mxu0 0.0
    %529 = vmatpush1.msra.mxu0 %v497
    %530 = vmatprep.subr.mxu0 0.0
    %531 = vmatpush1.msra.mxu0 0.0
    %532 = vmatprep.subr.mxu0 0.0
    %533 = vmatpush1.msra.mxu0 0.0
    %534 = vmatprep.subr.mxu0 0.0
    %535 = vmatpush1.msra.mxu0 0.0
    %536 = vmatprep.subr.mxu0 0.0
    %537 = vmatpush1.msra.mxu0 0.0
    %538 = vmatprep.subr.mxu0 0.0
    %539 = vmatpush1.msra.mxu0 0.0
    %540 = vmatprep.subr.mxu0 0.0
    %541 = vmatpush1.msra.mxu0 0.0
    %542 = vmatprep.subr.mxu0 0.0
    %543 = vmatpush1.msra.mxu0 0.0
    %544 = vmatprep.subr.mxu0 0.0
    %545 = vmatpush1.msra.mxu0 0.0
    %546 = vmatprep.subr.mxu0 0.0
    %547 = vmatpush1.msra.mxu0 0.0
    %548 = vmatprep.subr.mxu0 0.0
    %549 = vmatpush1.msra.mxu0 0.0
    %550 = vmatprep.subr.mxu0 0.0
    %551 = vmatpush1.msra.mxu0 0.0
    %552 = vmatprep.subr.mxu0 0.0
    %553 = vmatpush1.msra.mxu0 0.0
    %554 = vmatprep.subr.mxu0 0.0
    %555 = vmatpush1.msra.mxu0 0.0
    %556 = vmatprep.subr.mxu0 0.0
    %557 = vmatpush1.msra.mxu0 0.0
    %558 = vmatprep.subr.mxu0 0.0
    %559 = vmatpush1.msra.mxu0 0.0
    %560 = vmatprep.subr.mxu0 0.0
    %561 = vmatpush1.msra.mxu0 0.0
    %562 = vmatprep.mubr.f32.mxu0 0.0
    %563 = vmatmul.mubr.f32.gmra.mrb[0].mxu0 %v465
    %v564 = vpop.f32.mrb[0].mxu0
    %v565 = vadd.f32 0.0, %v564
    %v566 = vpop.f32.mrb[0].mxu0
    %567 = vdwg.mxu0
    %568 = vmatprep.subr.mxu0 0.0
    %569 = vmatpush1.msra.mxu0 %v466
    %570 = vmatprep.subr.mxu0 0.0
    %571 = vmatpush1.msra.mxu0 %v467
    %572 = vmatprep.subr.mxu0 0.0
    %573 = vmatpush1.msra.mxu0 %v468
    %574 = vmatprep.subr.mxu0 0.0
    %575 = vmatpush1.msra.mxu0 %v469
    %576 = vmatprep.subr.mxu0 0.0
    %577 = vmatpush1.msra.mxu0 %v470
    %578 = vmatprep.subr.mxu0 0.0
    %579 = vmatpush1.msra.mxu0 %v471
    %580 = vmatprep.subr.mxu0 0.0
    %581 = vmatpush1.msra.mxu0 %v472
    %582 = vmatprep.subr.mxu0 0.0
    %583 = vmatpush1.msra.mxu0 %v473
    %584 = vmatprep.subr.mxu0 0.0
    %585 = vmatpush1.msra.mxu0 %v474
    %586 = vmatprep.subr.mxu0 0.0
    %587 = vmatpush1.msra.mxu0 %v475
    %588 = vmatprep.subr.mxu0 0.0
    %589 = vmatpush1.msra.mxu0 %v476
    %590 = vmatprep.subr.mxu0 0.0
    %591 = vmatpush1.msra.mxu0 %v477
    %592 = vmatprep.subr.mxu0 0.0
    %593 = vmatpush1.msra.mxu0 %v478
    %594 = vmatprep.subr.mxu0 0.0
    %595 = vmatpush1.msra.mxu0 %v479
    %596 = vmatprep.subr.mxu0 0.0
    %597 = vmatpush1.msra.mxu0 %v480
    %598 = vmatprep.subr.mxu0 0.0
    %599 = vmatpush1.msra.mxu0 %v481
    %600 = vmatprep.subr.mxu0 0.0
    %601 = vmatpush1.msra.mxu0 0.0
    %602 = vmatprep.subr.mxu0 0.0
    %603 = vmatpush1.msra.mxu0 0.0
    %604 = vmatprep.subr.mxu0 0.0
    %605 = vmatpush1.msra.mxu0 0.0
    %606 = vmatprep.subr.mxu0 0.0
    %607 = vmatpush1.msra.mxu0 0.0
    %608 = vmatprep.subr.mxu0 0.0
    %609 = vmatpush1.msra.mxu0 0.0
    %610 = vmatprep.subr.mxu0 0.0
    %611 = vmatpush1.msra.mxu0 0.0
    %612 = vmatprep.subr.mxu0 0.0
    %613 = vmatpush1.msra.mxu0 0.0
    %614 = vmatprep.subr.mxu0 0.0
    %615 = vmatpush1.msra.mxu0 0.0
    %616 = vmatprep.subr.mxu0 0.0
    %617 = vmatpush1.msra.mxu0 0.0
    %618 = vmatprep.subr.mxu0 0.0
    %619 = vmatpush1.msra.mxu0 0.0
    %620 = vmatprep.subr.mxu0 0.0
    %621 = vmatpush1.msra.mxu0 0.0
    %622 = vmatprep.subr.mxu0 0.0
    %623 = vmatpush1.msra.mxu0 0.0
    %624 = vmatprep.subr.mxu0 0.0
    %625 = vmatpush1.msra.mxu0 0.0
    %626 = vmatprep.subr.mxu0 0.0
    %627 = vmatpush1.msra.mxu0 0.0
    %628 = vmatprep.subr.mxu0 0.0
    %629 = vmatpush1.msra.mxu0 0.0
    %630 = vmatprep.subr.mxu0 0.0
    %631 = vmatpush1.msra.mxu0 0.0
    %632 = vmatprep.mubr.f32.mxu0 0.0
    %633 = vmatmul.mubr.f32.gmra.mrb[0].mxu0 %v377
    %v634 = vpop.f32.mrb[0].mxu0
    %v635 = vadd.f32 %v565, %v634
    %v636 = vpop.f32.mrb[0].mxu0
    %637 = vdwg.mxu0
    %v638 = vld [vmem:[#allocation2 + $0x502] sm:$0x1]
    %v639 = vadd.f32 %v635, %v638
    %v640 = vtanh.pop %v639
    %v641 = vadd.f32 %v289, %v640
    %v642 = vld [vmem:[#allocation2 + $0x380] sm:$0xff]
    %v643 = vld [vmem:[#allocation2 + $0x388] sm:$0xff]
    %v644 = vld [vmem:[#allocation2 + $0x390] sm:$0xff]
    %v645 = vld [vmem:[#allocation2 + $0x398] sm:$0xff]
    %v646 = vld [vmem:[#allocation2 + $0x3a0] sm:$0xff]
    %v647 = vld [vmem:[#allocation2 + $0x3a8] sm:$0xff]
    %v648 = vld [vmem:[#allocation2 + $0x3b0] sm:$0xff]
    %v649 = vld [vmem:[#allocation2 + $0x3b8] sm:$0xff]
    %v650 = vld [vmem:[#allocation2 + $0x3c0] sm:$0xff]
    %v651 = vld [vmem:[#allocation2 + $0x3c8] sm:$0xff]
    %v652 = vld [vmem:[#allocation2 + $0x3d0] sm:$0xff]
    %v653 = vld [vmem:[#allocation2 + $0x3d8] sm:$0xff]
    %v654 = vld [vmem:[#allocation2 + $0x3e0] sm:$0xff]
    %v655 = vld [vmem:[#allocation2 + $0x3e8] sm:$0xff]
    %v656 = vld [vmem:[#allocation2 + $0x3f0] sm:$0xff]
    %v657 = vld [vmem:[#allocation2 + $0x3f8] sm:$0xff]
    %v658 = vld [vmem:[#allocation2 + $0x503] sm:$0x1]
    %659 = vmatprep.subr.mxu0 0.0
    %660 = vmatpush1.msra.mxu0 %v642
    %661 = vmatprep.subr.mxu0 0.0
    %662 = vmatpush1.msra.mxu0 %v643
    %663 = vmatprep.subr.mxu0 0.0
    %664 = vmatpush1.msra.mxu0 %v644
    %665 = vmatprep.subr.mxu0 0.0
    %666 = vmatpush1.msra.mxu0 %v645
    %667 = vmatprep.subr.mxu0 0.0
    %668 = vmatpush1.msra.mxu0 %v646
    %669 = vmatprep.subr.mxu0 0.0
    %670 = vmatpush1.msra.mxu0 %v647
    %671 = vmatprep.subr.mxu0 0.0
    %672 = vmatpush1.msra.mxu0 %v648
    %673 = vmatprep.subr.mxu0 0.0
    %674 = vmatpush1.msra.mxu0 %v649
    %675 = vmatprep.subr.mxu0 0.0
    %676 = vmatpush1.msra.mxu0 %v650
    %677 = vmatprep.subr.mxu0 0.0
    %678 = vmatpush1.msra.mxu0 %v651
    %679 = vmatprep.subr.mxu0 0.0
    %680 = vmatpush1.msra.mxu0 %v652
    %681 = vmatprep.subr.mxu0 0.0
    %682 = vmatpush1.msra.mxu0 %v653
    %683 = vmatprep.subr.mxu0 0.0
    %684 = vmatpush1.msra.mxu0 %v654
    %685 = vmatprep.subr.mxu0 0.0
    %686 = vmatpush1.msra.mxu0 %v655
    %687 = vmatprep.subr.mxu0 0.0
    %688 = vmatpush1.msra.mxu0 %v656
    %689 = vmatprep.subr.mxu0 0.0
    %690 = vmatpush1.msra.mxu0 %v657
    %691 = vmatprep.subr.mxu0 0.0
    %692 = vmatpush1.msra.mxu0 0.0
    %693 = vmatprep.subr.mxu0 0.0
    %694 = vmatpush1.msra.mxu0 0.0
    %695 = vmatprep.subr.mxu0 0.0
    %696 = vmatpush1.msra.mxu0 0.0
    %697 = vmatprep.subr.mxu0 0.0
    %698 = vmatpush1.msra.mxu0 0.0
    %699 = vmatprep.subr.mxu0 0.0
    %700 = vmatpush1.msra.mxu0 0.0
    %701 = vmatprep.subr.mxu0 0.0
    %702 = vmatpush1.msra.mxu0 0.0
    %703 = vmatprep.subr.mxu0 0.0
    %704 = vmatpush1.msra.mxu0 0.0
    %705 = vmatprep.subr.mxu0 0.0
    %706 = vmatpush1.msra.mxu0 0.0
    %707 = vmatprep.subr.mxu0 0.0
    %708 = vmatpush1.msra.mxu0 0.0
    %709 = vmatprep.subr.mxu0 0.0
    %710 = vmatpush1.msra.mxu0 0.0
    %711 = vmatprep.subr.mxu0 0.0
    %712 = vmatpush1.msra.mxu0 0.0
    %713 = vmatprep.subr.mxu0 0.0
    %714 = vmatpush1.msra.mxu0 0.0
    %715 = vmatprep.subr.mxu0 0.0
    %716 = vmatpush1.msra.mxu0 0.0
    %717 = vmatprep.subr.mxu0 0.0
    %718 = vmatpush1.msra.mxu0 0.0
    %719 = vmatprep.subr.mxu0 0.0
    %720 = vmatpush1.msra.mxu0 0.0
    %721 = vmatprep.subr.mxu0 0.0
    %722 = vmatpush1.msra.mxu0 0.0
    %723 = vmatprep.mubr.f32.mxu0 0.0
    %724 = vmatmul.mubr.f32.gmra.mrb[0].mxu0 %v641
    %v725 = vpop.f32.mrb[0].mxu0
    %v726 = vadd.f32 %v658, %v725
    %v727 = vpop.f32.mrb[0].mxu0
    %728 = vdwg.mxu0
    %v729 = vtanh.pop %v726
    %v730 = vld [vmem:[#allocation2 + $0x400] sm:$0xff]
    %v731 = vld [vmem:[#allocation2 + $0x408] sm:$0xff]
    %v732 = vld [vmem:[#allocation2 + $0x410] sm:$0xff]
    %v733 = vld [vmem:[#allocation2 + $0x418] sm:$0xff]
    %v734 = vld [vmem:[#allocation2 + $0x420] sm:$0xff]
    %v735 = vld [vmem:[#allocation2 + $0x428] sm:$0xff]
    %v736 = vld [vmem:[#allocation2 + $0x430] sm:$0xff]
    %v737 = vld [vmem:[#allocation2 + $0x438] sm:$0xff]
    %v738 = vld [vmem:[#allocation2 + $0x440] sm:$0xff]
    %v739 = vld [vmem:[#allocation2 + $0x448] sm:$0xff]
    %v740 = vld [vmem:[#allocation2 + $0x450] sm:$0xff]
    %v741 = vld [vmem:[#allocation2 + $0x458] sm:$0xff]
    %v742 = vld [vmem:[#allocation2 + $0x460] sm:$0xff]
    %v743 = vld [vmem:[#allocation2 + $0x468] sm:$0xff]
    %v744 = vld [vmem:[#allocation2 + $0x470] sm:$0xff]
    %v745 = vld [vmem:[#allocation2 + $0x478] sm:$0xff]
    %v746 = vld [vmem:[#allocation2 + $0x504] sm:$0x1]
    %747 = vmatprep.subr.mxu0 0.0
    %748 = vmatpush1.msra.mxu0 %v730
    %749 = vmatprep.subr.mxu0 0.0
    %750 = vmatpush1.msra.mxu0 %v731
    %751 = vmatprep.subr.mxu0 0.0
    %752 = vmatpush1.msra.mxu0 %v732
    %753 = vmatprep.subr.mxu0 0.0
    %754 = vmatpush1.msra.mxu0 %v733
    %755 = vmatprep.subr.mxu0 0.0
    %756 = vmatpush1.msra.mxu0 %v734
    %757 = vmatprep.subr.mxu0 0.0
    %758 = vmatpush1.msra.mxu0 %v735
    %759 = vmatprep.subr.mxu0 0.0
    %760 = vmatpush1.msra.mxu0 %v736
    %761 = vmatprep.subr.mxu0 0.0
    %762 = vmatpush1.msra.mxu0 %v737
    %763 = vmatprep.subr.mxu0 0.0
    %764 = vmatpush1.msra.mxu0 %v738
    %765 = vmatprep.subr.mxu0 0.0
    %766 = vmatpush1.msra.mxu0 %v739
    %767 = vmatprep.subr.mxu0 0.0
    %768 = vmatpush1.msra.mxu0 %v740
    %769 = vmatprep.subr.mxu0 0.0
    %770 = vmatpush1.msra.mxu0 %v741
    %771 = vmatprep.subr.mxu0 0.0
    %772 = vmatpush1.msra.mxu0 %v742
    %773 = vmatprep.subr.mxu0 0.0
    %774 = vmatpush1.msra.mxu0 %v743
    %775 = vmatprep.subr.mxu0 0.0
    %776 = vmatpush1.msra.mxu0 %v744
    %777 = vmatprep.subr.mxu0 0.0
    %778 = vmatpush1.msra.mxu0 %v745
    %779 = vmatprep.subr.mxu0 0.0
    %780 = vmatpush1.msra.mxu0 0.0
    %781 = vmatprep.subr.mxu0 0.0
    %782 = vmatpush1.msra.mxu0 0.0
    %783 = vmatprep.subr.mxu0 0.0
    %784 = vmatpush1.msra.mxu0 0.0
    %785 = vmatprep.subr.mxu0 0.0
    %786 = vmatpush1.msra.mxu0 0.0
    %787 = vmatprep.subr.mxu0 0.0
    %788 = vmatpush1.msra.mxu0 0.0
    %789 = vmatprep.subr.mxu0 0.0
    %790 = vmatpush1.msra.mxu0 0.0
    %791 = vmatprep.subr.mxu0 0.0
    %792 = vmatpush1.msra.mxu0 0.0
    %793 = vmatprep.subr.mxu0 0.0
    %794 = vmatpush1.msra.mxu0 0.0
    %795 = vmatprep.subr.mxu0 0.0
    %796 = vmatpush1.msra.mxu0 0.0
    %797 = vmatprep.subr.mxu0 0.0
    %798 = vmatpush1.msra.mxu0 0.0
    %799 = vmatprep.subr.mxu0 0.0
    %800 = vmatpush1.msra.mxu0 0.0
    %801 = vmatprep.subr.mxu0 0.0
    %802 = vmatpush1.msra.mxu0 0.0
    %803 = vmatprep.subr.mxu0 0.0
    %804 = vmatpush1.msra.mxu0 0.0
    %805 = vmatprep.subr.mxu0 0.0
    %806 = vmatpush1.msra.mxu0 0.0
    %807 = vmatprep.subr.mxu0 0.0
    %808 = vmatpush1.msra.mxu0 0.0
    %809 = vmatprep.subr.mxu0 0.0
    %810 = vmatpush1.msra.mxu0 0.0
    %811 = vmatprep.mubr.f32.mxu0 0.0
    %812 = vmatmul.mubr.f32.gmra.mrb[0].mxu0 %v729
    %v813 = vpop.f32.mrb[0].mxu0
    %v814 = vadd.f32 %v746, %v813
    %v815 = vpop.f32.mrb[0].mxu0
    %816 = vdwg.mxu0
    %v817 = vtanh.pop %v814
    %v818 = vld [vmem:[#allocation2 + $0x480] sm:$0xff]
    %v819 = vld [vmem:[#allocation2 + $0x488] sm:$0xff]
    %v820 = vld [vmem:[#allocation2 + $0x490] sm:$0xff]
    %v821 = vld [vmem:[#allocation2 + $0x498] sm:$0xff]
    %v822 = vld [vmem:[#allocation2 + $0x4a0] sm:$0xff]
    %v823 = vld [vmem:[#allocation2 + $0x4a8] sm:$0xff]
    %v824 = vld [vmem:[#allocation2 + $0x4b0] sm:$0xff]
    %v825 = vld [vmem:[#allocation2 + $0x4b8] sm:$0xff]
    %v826 = vld [vmem:[#allocation2 + $0x4c0] sm:$0xff]
    %v827 = vld [vmem:[#allocation2 + $0x4c8] sm:$0xff]
    %v828 = vld [vmem:[#allocation2 + $0x4d0] sm:$0xff]
    %v829 = vld [vmem:[#allocation2 + $0x4d8] sm:$0xff]
    %v830 = vld [vmem:[#allocation2 + $0x4e0] sm:$0xff]
    %v831 = vld [vmem:[#allocation2 + $0x4e8] sm:$0xff]
    %v832 = vld [vmem:[#allocation2 + $0x4f0] sm:$0xff]
    %v833 = vld [vmem:[#allocation2 + $0x4f8] sm:$0xff]
    %v834 = vld [vmem:[#allocation2 + $0x505] sm:$0x1]
    %835 = vmatprep.subr.mxu0 0.0
    %836 = vmatpush1.msra.mxu0 %v818
    %837 = vmatprep.subr.mxu0 0.0
    %838 = vmatpush1.msra.mxu0 %v819
    %839 = vmatprep.subr.mxu0 0.0
    %840 = vmatpush1.msra.mxu0 %v820
    %841 = vmatprep.subr.mxu0 0.0
    %842 = vmatpush1.msra.mxu0 %v821
    %843 = vmatprep.subr.mxu0 0.0
    %844 = vmatpush1.msra.mxu0 %v822
    %845 = vmatprep.subr.mxu0 0.0
    %846 = vmatpush1.msra.mxu0 %v823
    %847 = vmatprep.subr.mxu0 0.0
    %848 = vmatpush1.msra.mxu0 %v824
    %849 = vmatprep.subr.mxu0 0.0
    %850 = vmatpush1.msra.mxu0 %v825
    %851 = vmatprep.subr.mxu0 0.0
    %852 = vmatpush1.msra.mxu0 %v826
    %853 = vmatprep.subr.mxu0 0.0
    %854 = vmatpush1.msra.mxu0 %v827
    %855 = vmatprep.subr.mxu0 0.0
    %856 = vmatpush1.msra.mxu0 %v828
    %857 = vmatprep.subr.mxu0 0.0
    %858 = vmatpush1.msra.mxu0 %v829
    %859 = vmatprep.subr.mxu0 0.0
    %860 = vmatpush1.msra.mxu0 %v830
    %861 = vmatprep.subr.mxu0 0.0
    %862 = vmatpush1.msra.mxu0 %v831
    %863 = vmatprep.subr.mxu0 0.0
    %864 = vmatpush1.msra.mxu0 %v832
    %865 = vmatprep.subr.mxu0 0.0
    %866 = vmatpush1.msra.mxu0 %v833
    %867 = vmatprep.subr.mxu0 0.0
    %868 = vmatpush1.msra.mxu0 0.0
    %869 = vmatprep.subr.mxu0 0.0
    %870 = vmatpush1.msra.mxu0 0.0
    %871 = vmatprep.subr.mxu0 0.0
    %872 = vmatpush1.msra.mxu0 0.0
    %873 = vmatprep.subr.mxu0 0.0
    %874 = vmatpush1.msra.mxu0 0.0
    %875 = vmatprep.subr.mxu0 0.0
    %876 = vmatpush1.msra.mxu0 0.0
    %877 = vmatprep.subr.mxu0 0.0
    %878 = vmatpush1.msra.mxu0 0.0
    %879 = vmatprep.subr.mxu0 0.0
    %880 = vmatpush1.msra.mxu0 0.0
    %881 = vmatprep.subr.mxu0 0.0
    %882 = vmatpush1.msra.mxu0 0.0
    %883 = vmatprep.subr.mxu0 0.0
    %884 = vmatpush1.msra.mxu0 0.0
    %885 = vmatprep.subr.mxu0 0.0
    %886 = vmatpush1.msra.mxu0 0.0
    %887 = vmatprep.subr.mxu0 0.0
    %888 = vmatpush1.msra.mxu0 0.0
    %889 = vmatprep.subr.mxu0 0.0
    %890 = vmatpush1.msra.mxu0 0.0
    %891 = vmatprep.subr.mxu0 0.0
    %892 = vmatpush1.msra.mxu0 0.0
    %893 = vmatprep.subr.mxu0 0.0
    %894 = vmatpush1.msra.mxu0 0.0
    %895 = vmatprep.subr.mxu0 0.0
    %896 = vmatpush1.msra.mxu0 0.0
    %897 = vmatprep.subr.mxu0 0.0
    %898 = vmatpush1.msra.mxu0 0.0
    %899 = vmatprep.mubr.f32.mxu0 0.0
    %900 = vmatmul.mubr.f32.gmra.mrb[0].mxu0 %v817
    %v901 = vpop.f32.mrb[0].mxu0
    %v902 = vadd.f32 %v834, %v901
    %v903 = vpop.f32.mrb[0].mxu0
    %904 = vdwg.mxu0
    %vm905 = vcmask 1040384
    %v906 = vsel %vm905, %v902, -inf
    %907 = vmax.xlane.f32.xlu0 %v906
    %v908 = vpop.xlane.xlu0 %907
    %v909 = vsub.f32 %v902, %v908
    %v910 = vmul.f32 %v909, 1.442695
    %v911 = vpow.pop %v910
    %v912 = vsel %vm905, %v911, 0.0
    %913 = vadd.xlane.f32.xlu0 %v912
    %v914 = vpop.xlane.xlu0 %913
    %v915 = vrcp.pop %v914
    %v916 = vmul.f32 %v911, %v915
    %917 = vst [vmem:[#allocation5] sm:$0x1] %v916
    // Predicated region
    $region14: #{_net_forward.1} parent=1 // pred_check
      _
    $region15: #{_net_forward.1} parent=1 // pred_check_branch
      %919 = sbr.rel (0) target = $region17
    $region16: #{_net_forward.1} parent=1 // pred_region
      %s921 = ssub.s32 16, 16
      %922 = vsyncadd [#allocation4], %s921
      %s924 = sshll.u32 [#allocation5], 4
      %s925 = int_to_ptr.vmem [resolvable:$true] %s924
      %927 = dma.vmem_to_hbm [thread:$0]  %s925, 16, %s2, [#allocation4]
    $region17: #{_net_forward.1} parent=1 // pred_fallthru
      _
    // Predicated region
    $region18: #{_net_forward.1} parent=1 // pred_check
      _
    $region19: #{_net_forward.1} parent=1 // pred_check_branch
      %929 = sbr.rel (0) target = $region21
    $region20: #{_net_forward.1} parent=1 // pred_region
      %930 = dma.done [#allocation4], 16
    $region21: #{_net_forward.1} parent=1 // pred_fallthru
      _
    %931 = vsyncpa [#allocation3], 1
    %932 = vsyncpa [#allocation4], 1

</llo_original>
